<compile_context>
chip_gen: v7x
topology: tpu7x:2x2x1
jax: 0.10.0
libtpu: 0.0.40
codegen_flags: <defaults>
</compile_context>

<pallas_src>
import numpy as np
import jax
import jax.numpy as jnp
from jax import lax
from jax.experimental import pallas as pl
from jax.experimental.pallas import tpu as pltpu

PAD_ID = -1          # sequence-padding sentinel (never counted as a word)
LANES = 128


def _cdiv(a, b):
    return -(-a // b)


def _make_count_kernel(use_range: bool, need_mask: bool):
    """Build the counting kernel.

    Kernel refs:
      meta_ref  : SMEM (4,)  int32  [rows_valid, last_valid_chunk, pmin, pmax]
      punct_ref : SMEM (V,)  int32  punctuation ids (scan fallback only)
      tok_ref   : VMEM (B, TR, 128) int32 token ids (one row-chunk)
      out_ref   : VMEM (1, B, 1)    int32 per-core word counts
      acc_ref   : VMEM (B, 8, 128)  int32 elementwise keep-count accumulator
    """

    def kernel(meta_ref, punct_ref, tok_ref, out_ref, acc_ref):
        c = pl.program_id(1)
        n_c = pl.num_programs(1)

        @pl.when(c == 0)
        def _init():
            acc_ref[...] = jnp.zeros_like(acc_ref)

        toks = tok_ref[...]                          # (B, TR, 128) int32
        B, TR, L = toks.shape

        # keep = not padding AND not punctuation (bool all the way).
        keep = toks != PAD_ID
        if use_range:
            pmin = meta_ref[2]
            pmax = meta_ref[3]
            keep &= (toks < pmin) | (toks > pmax)
        else:
            V = punct_ref.shape[0]

            def body(k, kp):
                return kp & (toks != punct_ref[k])

            keep = lax.fori_loop(0, V, body, keep, unroll=True)

        if need_mask:
            # Mask rows beyond the true (un-padded) row count: last partial
            # chunk and any fully over-covered chunks contribute nothing.
            chunk = pl.program_id(0) * n_c + c
            row_ids = lax.broadcasted_iota(jnp.int32, (B, TR, L), 1) + chunk * TR
            keep &= row_ids < meta_ref[0]

        # Deferred reduction: pure VALU vreg adds into (B, 8, 128) scratch.
        acc_ref[...] += keep.astype(jnp.int32).reshape(B, TR // 8, 8, L).sum(axis=1)

        @pl.when(c == n_c - 1)
        def _finalize():
            # Single cross-lane/sublane (XLU) reduce + lane-sparse write,
            # once per core instead of once per grid step.
            total = jnp.sum(jnp.sum(acc_ref[...], axis=2, keepdims=True), axis=1)
            out_ref[...] = total[None, :, :]         # (1, B, 1)

    return kernel


def count_non_punct(tokens, punct_ids, *, tile_rows=None, split=2,
                    vmem_budget_bytes=8 << 20):
    """word_count per batch row: tokens [B, S] int32 -> counts [B] int32."""
    B, S = tokens.shape
    tokens = tokens.astype(jnp.int32)
    punct_ids = jnp.asarray(punct_ids, dtype=jnp.int32).reshape(-1)
    split = max(1, int(split))

    # Trace-time check: do the punct ids form a contiguous range (default
    # arange(32) does)?  Then membership is a 2-compare range test; otherwise
    # fall back to the fully-unrolled bool &=-fold over the id list.
    try:
        pvals = np.unique(np.asarray(punct_ids))
        use_range = pvals.size > 0 and int(pvals[-1]) - int(pvals[0]) + 1 == pvals.size
        pmin = int(pvals[0]) if pvals.size else 0
        pmax = int(pvals[-1]) if pvals.size else -1
    except Exception:            # punct_ids is traced -> scan fallback
        use_range, pmin, pmax = False, 0, -1

    # Minimal pad: only up to the next multiple of 128 so (B, rows, 128) is a
    # layout-preserving reshape; ragged row/chunk tails are masked in-kernel
    # instead of materializing a tile_rows-padded copy of the tokens.
    # TODO(synk): for S % 128 != 0 one small concatenate copy remains; a
    # manual-DMA path could remove it but is not worth it for this op.
    rows = _cdiv(S, LANES)
    if rows * LANES != S:
        pad = jnp.full((B, rows * LANES - S), PAD_ID, dtype=jnp.int32)
        tokens = jnp.concatenate([tokens, pad], axis=1)
    tokens3 = tokens.reshape(B, rows, LANES)         # lane/sublane dense

    # VMEM-budget-driven tile_rows (double-buffered input), multiple of 8.
    if tile_rows is None:
        per_buf = max(vmem_budget_bytes // 2, B * LANES * 4 * 8)
        tile_rows = (per_buf // (B * LANES * 4)) // 8 * 8
    tile_rows = max(8, int(tile_rows) // 8 * 8)
    rows_per_split = _cdiv(rows, split)
    tile_rows = min(tile_rows, max(8, _cdiv(rows_per_split, 8) * 8))

    n_valid_chunks = _cdiv(rows, tile_rows)
    chunks_per_split = _cdiv(n_valid_chunks, split)
    need_mask = (split * chunks_per_split * tile_rows) != rows

    meta = jnp.array([rows, n_valid_chunks - 1, pmin, pmax], dtype=jnp.int32)

    in_block_bytes = B * tile_rows * LANES * 4
    vmem_limit = int(max(2 * in_block_bytes + B * 8 * LANES * 4 + (1 << 20),
                         4 << 20))

    kernel = _make_count_kernel(use_range, need_mask)

    def tok_index_map(p, c, meta_ref, punct_ref):
        chunk = p * chunks_per_split + c
        # Clamp fully-out-of-range chunk indices (possible when split *
        # chunks_per_split over-covers); their contents are masked anyway.
        return (0, jnp.minimum(chunk, meta_ref[1]), 0)

    partials = pl.pallas_call(
        kernel,
        out_shape=jax.ShapeDtypeStruct((split, B, 1), jnp.int32),
        grid_spec=pltpu.PrefetchScalarGridSpec(
            num_scalar_prefetch=2,
            grid=(split, chunks_per_split),
            in_specs=[pl.BlockSpec((B, tile_rows, LANES), tok_index_map)],
            out_specs=pl.BlockSpec((1, B, 1),
                                   lambda p, c, meta_ref, punct_ref: (p, 0, 0)),
            scratch_shapes=[pltpu.VMEM((B, 8, LANES), jnp.int32)],
        ),
        compiler_params=pltpu.CompilerParams(
            dimension_semantics=("parallel", "arbitrary"),
            vmem_limit_bytes=vmem_limit,
        ),
    )(meta, punct_ids, tokens3)

    return jnp.sum(partials[:, :, 0], axis=0)        # (B,) int32


class CountWordsPallas:
    """JAX/Pallas analogue of CountWords.

    word_count = len([t for t in spacied[0] if not t.is_punct]) is computed
    per batch row by the Pallas kernel (is_punct == id membership in
    `punct_ids`); the count is appended to the feature vector as a trailing
    column (numeric analogue of np.append(feature, word_count)).
    """

    def __init__(self, punct_ids=None, tile_rows=None, split=2):
        if punct_ids is None:
            # TODO(synk): spaCy's linguistic `is_punct` attribute has no tensor
            # equivalent; use a fixed punctuation-id vocabulary instead.
            punct_ids = jnp.arange(32, dtype=jnp.int32)   # ids 0..31 ~ punctuation
        self.punct_ids = jnp.asarray(punct_ids, dtype=jnp.int32)
        self.tile_rows = tile_rows
        self.split = split

    def forward(self, sample):
        sid, content, label, spacied, feature = sample
        word_count = count_non_punct(spacied[0], self.punct_ids,
                                     tile_rows=self.tile_rows,
                                     split=self.split)                # (B,)
        feature = jnp.concatenate(
            [feature, word_count[:, None].astype(feature.dtype)], axis=-1)
        return (sid, content, label, spacied, feature)


if __name__ == "__main__":
    key = jax.random.PRNGKey(0)
    k_tok, k_feat = jax.random.split(key)

    # Ragged S (not a multiple of 128) exercises the in-kernel tail masking,
    # multi-chunk accumulation and the 2-way core split.
    B, S, F = 2, 4133, 32
    content_tokens = jax.random.randint(k_tok, (B, S), 0, 1000, dtype=jnp.int32)
    feature = jax.random.normal(k_feat, (B, F), dtype=jnp.float32)
    sid = jnp.arange(B, dtype=jnp.int32)
    label = jnp.zeros((B,), dtype=jnp.int32)
    spacied = [content_tokens]          # stand-in for [self.spacy(content)]

    module = CountWordsPallas(tile_rows=8, split=2)   # small tiles -> real grid
    sample = (sid, content_tokens, label, spacied, feature)
    out_sid, out_content, out_label, out_spacied, out_feature = module.forward(sample)
    jax.block_until_ready(out_feature)

    # Plain-JAX reference of the counting path (range-check kernel).
    ref_is_punct = jnp.isin(content_tokens, module.punct_ids)
    ref_keep = jnp.logical_and(~ref_is_punct, content_tokens != PAD_ID)
    ref_count = jnp.sum(ref_keep.astype(jnp.int32), axis=1)
    ref_feature = jnp.concatenate(
        [feature, ref_count[:, None].astype(feature.dtype)], axis=-1)

    assert out_feature.shape == (B, F + 1)
    assert bool(jnp.all(out_feature[:, -1].astype(jnp.int32) == ref_count)), \
        "word_count mismatch vs reference (range kernel)"
    assert bool(jnp.all(out_feature == ref_feature)), "feature mismatch vs reference"
    assert bool(jnp.all(out_content == content_tokens)), "content must be unchanged"

    # Fallback path: non-contiguous punctuation ids -> fully-unrolled scan kernel.
    odd_ids = jnp.array([3, 17, 42, 101, 400], dtype=jnp.int32)
    cnt_scan = count_non_punct(content_tokens, odd_ids, tile_rows=16, split=2)
    jax.block_until_ready(cnt_scan)
    ref_scan = jnp.sum(
        (jnp.logical_and(~jnp.isin(content_tokens, odd_ids),
                         content_tokens != PAD_ID)).astype(jnp.int32), axis=1)
    assert bool(jnp.all(cnt_scan == ref_scan)), \
        "word_count mismatch vs reference (scan-fallback kernel)"

    print("KERNEL_OK")
</pallas_src>

<mosaic_0001>
module attributes {stable_mosaic.version = 11 : i64} {
  func.func @kernel(%arg0: i32, %arg1: i32, %arg2: memref<4xi32, #tpu.memory_space<smem>>, %arg3: memref<32xi32, #tpu.memory_space<smem>>, %arg4: memref<2x8x128xi32, #tpu.memory_space<vmem>>, %arg5: memref<1x2x1xi32, #tpu.memory_space<vmem>>, %arg6: memref<2x8x128xi32, #tpu.memory_space<vmem>>) attributes {dimension_semantics = [#tpu.dimension_semantics<parallel>, #tpu.dimension_semantics<arbitrary>], iteration_bounds = array<i64: 2, 3>, scalar_prefetch = 2 : i64, scratch_operands = 1 : i64, tpu.core_type = #tpu.core_type<tc>, window_params = [{transform_indices = @transform_0, window_bounds = array<i64: 2, 8, 128>}, {transform_indices = @transform_1, window_bounds = array<i64: 1, 2, 1>}]} {
    %c0_i32 = arith.constant 0 : i32
    %0 = arith.cmpi eq, %arg1, %c0_i32 : i32
    %1 = arith.extui %0 : i1 to i32
    %c0_i32_0 = arith.constant 0 : i32
    %2 = arith.cmpi ne, %1, %c0_i32_0 : i32
    scf.if %2 {
      %c0_i32_11 = arith.constant 0 : i32
      %33 = vector.broadcast %c0_i32_11 : i32 to vector<2x8x128xi32>
      %c0_12 = arith.constant 0 : index
      %c0_13 = arith.constant 0 : index
      %c0_14 = arith.constant 0 : index
      %34 = vector.load %arg6[%c0_12, %c0_13, %c0_14] : memref<2x8x128xi32, #tpu.memory_space<vmem>>, vector<2x8x128xi32>
      tpu.vector_store %arg6[%c0_12, %c0_13, %c0_14], %33 {strides = array<i32>} : memref<2x8x128xi32, #tpu.memory_space<vmem>>, vector<2x8x128xi32>,
    } else {
    }
    %c0 = arith.constant 0 : index
    %c0_1 = arith.constant 0 : index
    %c0_2 = arith.constant 0 : index
    %3 = vector.load %arg4[%c0, %c0_1, %c0_2] : memref<2x8x128xi32, #tpu.memory_space<vmem>>, vector<2x8x128xi32>
    %c-1_i32 = arith.constant -1 : i32
    %4 = vector.broadcast %c-1_i32 : i32 to vector<2x8x128xi32>
    %5 = arith.cmpi ne, %3, %4 : vector<2x8x128xi32>
    %c2 = arith.constant 2 : index
    %6 = memref.load %arg2[%c2] : memref<4xi32, #tpu.memory_space<smem>>
    %c3 = arith.constant 3 : index
    %7 = memref.load %arg2[%c3] : memref<4xi32, #tpu.memory_space<smem>>
    %8 = vector.broadcast %6 : i32 to vector<2x8x128xi32>
    %9 = arith.cmpi slt, %3, %8 : vector<2x8x128xi32>
    %10 = vector.broadcast %7 : i32 to vector<2x8x128xi32>
    %11 = arith.cmpi sgt, %3, %10 : vector<2x8x128xi32>
    %12 = arith.ori %9, %11 : vector<2x8x128xi1>
    %13 = arith.andi %5, %12 : vector<2x8x128xi1>
    %c3_i32 = arith.constant 3 : i32
    %14 = arith.muli %arg0, %c3_i32 : i32
    %15 = arith.addi %14, %arg1 : i32
    %16 = tpu.iota {dimensions = array<i32: 1>} : vector<2x8x128xi32>
    %c8_i32 = arith.constant 8 : i32
    %17 = arith.muli %15, %c8_i32 : i32
    %18 = vector.broadcast %17 : i32 to vector<2x8x128xi32>
    %19 = arith.addi %16, %18 : vector<2x8x128xi32>
    %c0_3 = arith.constant 0 : index
    %20 = memref.load %arg2[%c0_3] : memref<4xi32, #tpu.memory_space<smem>>
    %21 = vector.broadcast %20 : i32 to vector<2x8x128xi32>
    %22 = arith.cmpi slt, %19, %21 : vector<2x8x128xi32>
    %23 = arith.andi %13, %22 : vector<2x8x128xi1>
    %c0_4 = arith.constant 0 : index
    %c0_5 = arith.constant 0 : index
    %c0_6 = arith.constant 0 : index
    %24 = vector.load %arg6[%c0_4, %c0_5, %c0_6] : memref<2x8x128xi32, #tpu.memory_space<vmem>>, vector<2x8x128xi32>
    %25 = arith.extui %23 : vector<2x8x128xi1> to vector<2x8x128xi32>
    %26 = vector.shape_cast %25 : vector<2x8x128xi32> to vector<2x1x8x128xi32>
    %cst = arith.constant dense<0> : vector<2x8x128xi32>
    %27 = vector.multi_reduction <add>, %26, %cst [1] : vector<2x1x8x128xi32> to vector<2x8x128xi32>
    %28 = arith.addi %24, %27 : vector<2x8x128xi32>
    %c0_7 = arith.constant 0 : index
    %c0_8 = arith.constant 0 : index
    %c0_9 = arith.constant 0 : index
    %29 = vector.load %arg6[%c0_7, %c0_8, %c0_9] : memref<2x8x128xi32, #tpu.memory_space<vmem>>, vector<2x8x128xi32>
    tpu.vector_store %arg6[%c0_7, %c0_8, %c0_9], %28 {strides = array<i32>} : memref<2x8x128xi32, #tpu.memory_space<vmem>>, vector<2x8x128xi32>,
    %c2_i32 = arith.constant 2 : i32
    %30 = arith.cmpi eq, %arg1, %c2_i32 : i32
    %31 = arith.extui %30 : i1 to i32
    %c0_i32_10 = arith.constant 0 : i32
    %32 = arith.cmpi ne, %31, %c0_i32_10 : i32
    scf.if %32 {
      %c0_11 = arith.constant 0 : index
      %c0_12 = arith.constant 0 : index
      %c0_13 = arith.constant 0 : index
      %33 = vector.load %arg6[%c0_11, %c0_12, %c0_13] : memref<2x8x128xi32, #tpu.memory_space<vmem>>, vector<2x8x128xi32>
      %cst_14 = arith.constant dense<0> : vector<2x8xi32>
      %34 = vector.multi_reduction <add>, %33, %cst_14 [2] : vector<2x8x128xi32> to vector<2x8xi32>
      %35 = vector.shape_cast %34 : vector<2x8xi32> to vector<2x8x1xi32>
      %cst_15 = arith.constant dense<0> : vector<2x1xi32>
      %36 = vector.multi_reduction <add>, %35, %cst_15 [1] : vector<2x8x1xi32> to vector<2x1xi32>
      %37 = vector.shape_cast %36 : vector<2x1xi32> to vector<1x2x1xi32>
      %c0_16 = arith.constant 0 : index
      %c0_17 = arith.constant 0 : index
      %c0_18 = arith.constant 0 : index
      %38 = vector.load %arg5[%c0_16, %c0_17, %c0_18] : memref<1x2x1xi32, #tpu.memory_space<vmem>>, vector<1x2x1xi32>
      tpu.vector_store %arg5[%c0_16, %c0_17, %c0_18], %37 {strides = array<i32>} : memref<1x2x1xi32, #tpu.memory_space<vmem>>, vector<1x2x1xi32>,
    } else {
    }
    return
  }
  func.func @transform_0(%arg0: i32, %arg1: i32, %arg2: memref<4xi32, #tpu.memory_space<smem>>, %arg3: memref<32xi32, #tpu.memory_space<smem>>) -> (i32, i32, i32) {
    %c3_i32 = arith.constant 3 : i32
    %0 = arith.muli %arg0, %c3_i32 : i32
    %1 = arith.addi %0, %arg1 : i32
    %c1 = arith.constant 1 : index
    %2 = memref.load %arg2[%c1] : memref<4xi32, #tpu.memory_space<smem>>
    %3 = arith.minsi %1, %2 : i32
    %c0_i32 = arith.constant 0 : i32
    %c0_i32_0 = arith.constant 0 : i32
    %c0_i32_1 = arith.constant 0 : i32
    return %c0_i32, %3, %c0_i32_0 : i32, i32, i32
  }
  func.func @transform_1(%arg0: i32, %arg1: i32, %arg2: memref<4xi32, #tpu.memory_space<smem>>, %arg3: memref<32xi32, #tpu.memory_space<smem>>) -> (i32, i32, i32) {
    %c0_i32 = arith.constant 0 : i32
    %c0_i32_0 = arith.constant 0 : i32
    %c0_i32_1 = arith.constant 0 : i32
    return %arg0, %c0_i32, %c0_i32_0 : i32, i32, i32
  }
}

</mosaic_0001>

<llo_original>
// kernel: tpu_custom_call.1
$region0: #{tpu_custom_call.1}
  #allocation0 [shape = 'u32[]', space=smem, size = 0x4, offset = 0x4, fixed_abs, tag = 'smem constant byte address 0x4 - core index']
  #allocation1 [shape = 'u32[144,128]{1,0:T(1,128)}', space=vmem, size = 0x12000, scoped, tag = 'internal scratch']
  #allocation2 [shape = 's32[2,8,128]{2,1,0:T(8,128)}', space=vmem, size = 0x2000, scoped, tag = 'scratch operand']
  #allocation3 [shape = 's32[1]{0}', space=sflag, size = 0x4, scoped, tag = 'scoped memory for tpu_custom_call.1']
  #allocation4 [shape = 'u8[512]{0}', space=smem, size = 0x200, scoped, tag = 'prefetched SMEM operand 0']
  #allocation5 [shape = 'u8[512]{0}', space=smem, size = 0x200, scoped, tag = 'prefetched SMEM operand 1']
  %s0 = inlined_call_operand.vmem [shape: s32[4], index: 0, kind: input, shape index: {}]
  %s1 = inlined_call_operand.vmem [shape: s32[32], index: 1, kind: input, shape index: {}]
  %s2 = inlined_call_operand.vmem [shape: s32[2,33,128], index: 2, kind: input, shape index: {}]
  %s3 = inlined_call_operand.vmem [shape: s32[2,2,1], index: 3, kind: output, shape index: {}]
  %s4 = sld [smem:[#allocation0]]
  $region83: #{tpu_custom_call.1} parent=0
    _
  %s6 = ssub.s32 1, %s4
  %s7 = scalar_select 0, %s6, %s4
  %s8 = sshll.u32 %s0, 4
  %s9 = int_to_ptr.vmem [resolvable:$true] %s8
  %11 = dma.vmem_to_smem %s9, 16, [#allocation4], [#allocation3]
  %s12 = sshll.u32 %s1, 4
  %s13 = int_to_ptr.vmem [resolvable:$true] %s12
  %15 = dma.vmem_to_smem %s13, 16, [#allocation5], [#allocation3]
  %16 = dma.done [#allocation3], 32
  %17 = sfence
  $region1: #{tpu_custom_call.1} parent=0
    #allocation6 [shape = 'u8[16384]{0}', space=vmem, size = 0x4000, scoped, tag = 'input window, operand 2']
    loop: start=0, step=1, limit=8
    $region2: #{tpu_custom_call.1} parent=1 // loop_pre_header
      _
    $region3: #{tpu_custom_call.1} parent=1 // loop_header
      %s19 = sphi 0, %s23
      %p20 = scmp.ge.s32.totalorder %s19, 8
      %s26 = sphi 0, %s38
      %s27 = sphi 0, %s34
      %s28 = sphi 0, %s26
      %s29 = sphi 0, %s27
      %s30 = sphi 0, %s28
      %s31 = sphi 0, %s29
      %s51 = sphi 0, %s53
      %s54 = sphi 0, %s51
      %s55 = sphi 0, %s54
      %s71 = sphi 0, %s55
      %s77 = sphi 0, %s79
      %s80 = sphi 0, %s77
      %s81 = sphi 0, %s80
      %s97 = sphi 0, %s81
    $region4: #{tpu_custom_call.1} parent=1 // loop_header_branch
      %22 = sbr.rel (%p20) target = $region8
    $region5: #{tpu_custom_call.1} parent=1 // loop_body
      %s24 = ssub.s32 %s19, 1
      %s25 = ssub.s32 %s19, 2
      %s32 = sadd.s32 1, %s27
      %p33 = scmp.ge.s32.totalorder %s32, 3
      %s34 = scalar_select %p33, 0, %s32
      %s35 = sadd.s32 1, %s26
      %s36 = scalar_select %p33, %s35, %s26
      %p37 = scmp.ge.s32.totalorder %s36, 2
      %s38 = scalar_select %p37, 0, %s36
      %s39 = smul.u32 %s26, 3
      %s40 = sadd.s32 %s39, %s27
      %s41 = sld [smem:[#allocation4 + $0x1]]
      %p42 = scmp.lt.s32.totalorder %s40, %s41
      %s43 = scalar_select %p42, %s40, %s41
      %s44 = smul.u32 %s38, 3
      %s45 = sadd.s32 %s44, %s34
      %s46 = sld [smem:[#allocation4 + $0x1]]
      %p47 = scmp.lt.s32.totalorder %s45, %s46
      %s48 = scalar_select %p47, %s45, %s46
      %s49 = ssub.s32 %s43, %s48
      %p50 = scmp.eq.s32.totalorder %s49, 0
      %s52 = sadd.s32 %s51, 1
      %s53 = scalar_select %p50, %s51, %s52
      %p56 = pneg %p50
      %p57 = scmp.eq.s32.totalorder %s19, 5
      %p58 = por %p56, %p57
      %p59 = scmp.ne.s32.totalorder %s51, %s54
      %p60 = scmp.eq.s32.totalorder %s19, 0
      %p61 = por %p59, %p60
      %p62 = scmp.ne.s32.totalorder %s51, %s54
      %p63 = scmp.eq.s32.totalorder %s24, 5
      %p64 = por %p62, %p63
      %p65 = scmp.ne.s32.totalorder %s54, %s55
      %p66 = scmp.eq.s32.totalorder %s24, 0
      %p67 = por %p65, %p66
      %p68 = scmp.ne.s32.totalorder %s54, %s55
      %p69 = scmp.eq.s32.totalorder %s25, 5
      %p70 = por %p68, %p69
      %p72 = scmp.ne.s32.totalorder %s55, %s71
      %p73 = scmp.eq.s32.totalorder %s25, 0
      %p74 = por %p72, %p73
      %s75 = ssub.s32 %s26, %s38
      %p76 = scmp.eq.s32.totalorder %s75, 0
      %s78 = sadd.s32 %s77, 1
      %s79 = scalar_select %p76, %s77, %s78
      %p82 = pneg %p76
      %p83 = scmp.eq.s32.totalorder %s19, 5
      %p84 = por %p82, %p83
      %p85 = scmp.ne.s32.totalorder %s77, %s80
      %p86 = scmp.eq.s32.totalorder %s19, 0
      %p87 = por %p85, %p86
      %p88 = scmp.ne.s32.totalorder %s77, %s80
      %p89 = scmp.eq.s32.totalorder %s24, 5
      %p90 = por %p88, %p89
      %p91 = scmp.ne.s32.totalorder %s80, %s81
      %p92 = scmp.eq.s32.totalorder %s24, 0
      %p93 = por %p91, %p92
      %p94 = scmp.ne.s32.totalorder %s80, %s81
      %p95 = scmp.eq.s32.totalorder %s25, 5
      %p96 = por %p94, %p95
      %p98 = scmp.ne.s32.totalorder %s81, %s97
      %p99 = scmp.eq.s32.totalorder %s25, 0
      %p100 = por %p98, %p99
      %p101 = scmp.le.s32.totalorder 1, %s19
      %p102 = scmp.lt.s32.totalorder %s19, 7
      %p103 = pnand %p101, %p102
      %p104 = pneg %p103
      // Predicated region
      $region9: #{tpu_custom_call.1} parent=5 // pred_check
        _
      $region10: #{tpu_custom_call.1} parent=5 // pred_check_branch
        %106 = sbr.rel (%p103) target = $region12
      $region11: #{tpu_custom_call.1} parent=5 // pred_region
        %s107 = ssub.s32 %s19, 1
      $region12: #{tpu_custom_call.1} parent=5 // pred_fallthru
        _
      %p108 = scmp.lt.s32.totalorder %s19, 6
      // Predicated region
      $region13: #{tpu_custom_call.1} parent=5 // pred_check
        %p109 = pneg %p108
      $region14: #{tpu_custom_call.1} parent=5 // pred_check_branch
        %111 = sbr.rel (%p109) target = $region16
      $region15: #{tpu_custom_call.1} parent=5 // pred_region
        // Predicated region
        $region17: #{tpu_custom_call.1} parent=15 // pred_check
          %p112 = pneg %p61
        $region18: #{tpu_custom_call.1} parent=15 // pred_check_branch
          %114 = sbr.rel (%p112) target = $region20
        $region19: #{tpu_custom_call.1} parent=15 // pred_region
          %s115 = sand.u32 %s51, 1
          %s116 = sand.u32 %s51, 1
          %s117 = smul.addr %s116, 16
          %s118 = scalar_lea.vmem [#allocation6], %s117
          %s119 = smul.u32 %s26, 3
          %s120 = sadd.s32 %s119, %s27
          %s121 = sld [smem:[#allocation4 + $0x1]]
          %p122 = scmp.lt.s32.totalorder %s120, %s121
          %s123 = scalar_select %p122, %s120, %s121
          %s124 = smul.addr %s123, 8
          %s125 = scalar_lea.vmem %s2, %s124
          // Predicated region
          $region21: #{tpu_custom_call.1} parent=19 // pred_check
            _
          $region22: #{tpu_custom_call.1} parent=19 // pred_check_branch
            %127 = sbr.rel (0) target = $region24
          $region23: #{tpu_custom_call.1} parent=19 // pred_region
            // Predicated region
            $region25: #{tpu_custom_call.1} parent=23 // pred_check
              _
            $region26: #{tpu_custom_call.1} parent=23 // pred_check_branch
              %129 = sbr.rel (0) target = $region28
            $region27: #{tpu_custom_call.1} parent=23 // pred_region
              // Predicated region
              $region40: #{tpu_custom_call.1} parent=27 // pred_check
                _
              $region41: #{tpu_custom_call.1} parent=27 // pred_check_branch
                %146 = sbr.rel (0) target = $region43
              $region42: #{tpu_custom_call.1} parent=27 // pred_region
                loop: start=0, step=1, limit=1
                $region44: #{tpu_custom_call.1} parent=42 // loop_pre_header
                  _
                $region45: #{tpu_custom_call.1} parent=42 // loop_header
                  %s148 = sphi 0, %s152
                  %p149 = scmp.ge.s32.totalorder %s148, 1
                  %s153 = sphi %s125, %s125
                  %s154 = sphi %s118, %s118
                $region46: #{tpu_custom_call.1} parent=42 // loop_header_branch
                  %151 = sbr.rel (%p149) target = $region50
                $region47: #{tpu_custom_call.1} parent=42 // loop_body
                  %v155 = vld [vmem:[%s153] sm:$0xff]
                  %156 = vst [vmem:[%s154] sm:$0xff] %v155
                  %v157 = vld [vmem:[%s153 + $0x28] sm:$0xff]
                  %158 = vst [vmem:[%s154 + $0x8] sm:$0xff] %v157
                $region48: #{tpu_custom_call.1} parent=42 // loop_footer
                  %s152 = sadd.s32 1, %s148
                $region49: #{tpu_custom_call.1} parent=42 // loop_footer_branch
                  %147 = sbr.rel target = $region45
                $region50: #{tpu_custom_call.1} parent=42 // loop_exit
                  _
              $region43: #{tpu_custom_call.1} parent=27 // pred_fallthru
                _
              // Predicated region
              $region51: #{tpu_custom_call.1} parent=27 // pred_check
                _
              $region52: #{tpu_custom_call.1} parent=27 // pred_check_branch
                %160 = sbr.rel target = $region54
              $region53: #{tpu_custom_call.1} parent=27 // pred_region
                _
              $region54: #{tpu_custom_call.1} parent=27 // pred_fallthru
                _
            $region28: #{tpu_custom_call.1} parent=23 // pred_fallthru
              _
            // Predicated region
            $region29: #{tpu_custom_call.1} parent=23 // pred_check
              _
            $region30: #{tpu_custom_call.1} parent=23 // pred_check_branch
              %131 = sbr.rel target = $region32
            $region31: #{tpu_custom_call.1} parent=23 // pred_region
              loop: start=0, step=1, limit=1
              $region33: #{tpu_custom_call.1} parent=31 // loop_pre_header
                _
              $region34: #{tpu_custom_call.1} parent=31 // loop_header
                %s134 = sphi 0, %s138
                %p135 = scmp.ge.s32.totalorder %s134, 1
                %s139 = sphi %s125, %s125
                %s140 = sphi %s118, %s118
              $region35: #{tpu_custom_call.1} parent=31 // loop_header_branch
                %137 = sbr.rel (%p135) target = $region39
              $region36: #{tpu_custom_call.1} parent=31 // loop_body
                %v141 = vld [vmem:[%s139] sm:$0xff]
                %142 = vst [vmem:[%s140] sm:$0xff] %v141
                %v143 = vld [vmem:[%s139 + $0x28] sm:$0xff]
                %144 = vst [vmem:[%s140 + $0x8] sm:$0xff] %v143
              $region37: #{tpu_custom_call.1} parent=31 // loop_footer
                %s138 = sadd.s32 1, %s134
              $region38: #{tpu_custom_call.1} parent=31 // loop_footer_branch
                %133 = sbr.rel target = $region34
              $region39: #{tpu_custom_call.1} parent=31 // loop_exit
                _
            $region32: #{tpu_custom_call.1} parent=23 // pred_fallthru
              _
          $region24: #{tpu_custom_call.1} parent=19 // pred_fallthru
            _
          %161 = vnop
        $region20: #{tpu_custom_call.1} parent=15 // pred_fallthru
          _
      $region16: #{tpu_custom_call.1} parent=5 // pred_fallthru
        _
      %p162 = scmp.le.s32.totalorder 1, %s19
      %p163 = scmp.lt.s32.totalorder %s19, 7
      %p164 = pnand %p162, %p163
      %p165 = pneg %p164
      // Predicated region
      $region55: #{tpu_custom_call.1} parent=5 // pred_check
        _
      $region56: #{tpu_custom_call.1} parent=5 // pred_check_branch
        %167 = sbr.rel (%p164) target = $region58
      $region57: #{tpu_custom_call.1} parent=5 // pred_region
        %s168 = ssub.s32 %s19, 1
        %s169 = sand.u32 %s54, 1
        %s170 = sand.u32 %s54, 1
        %s171 = smul.addr %s170, 16
        %s172 = scalar_lea.vmem [#allocation6], %s171
        // Predicated region
        $region59: #{tpu_custom_call.1} parent=57 // pred_check
          %p173 = pneg %p67
        $region60: #{tpu_custom_call.1} parent=57 // pred_check_branch
          %175 = sbr.rel (%p173) target = $region62
        $region61: #{tpu_custom_call.1} parent=57 // pred_region
          _
        $region62: #{tpu_custom_call.1} parent=57 // pred_fallthru
          _
        %s176 = sand.u32 %s54, 1
        %s177 = sand.u32 %s54, 1
        %s178 = smul.addr %s177, 16
        %s179 = scalar_lea.vmem [#allocation6], %s178
        %p180 = pneg %p67
        %p181 = pneg %p64
        %p182 = pneg %p93
        %p183 = pneg %p90
        %p184 = scmp.lt.s32.totalorder %s28, 1
        %s185 = scalar_select %p184, %s28, 1
        %s186 = smul.addr %s185, 2
        %s187 = scalar_lea.vmem %s3, %s186
        %s188 = smul.u32 %s28, 3
        %s189 = sadd.s32 %s188, %s29
        %s190 = sld [smem:[#allocation4 + $0x1]]
        %p191 = scmp.lt.s32.totalorder %s189, %s190
        %s192 = scalar_select %p191, %s189, %s190
        %p193 = scmp.lt.s32.totalorder %s28, 1
        %s194 = scalar_select %p193, %s28, 1
        %s195 = smul.addr %s194, 2
        %s196 = scalar_lea.vmem %s3, %s195
        %p197 = scmp.eq.s32.totalorder %s29, 0
        // Predicated region
        $region63: #{tpu_custom_call.1} parent=57 // pred_check
          %p198 = pneg %p197
        $region64: #{tpu_custom_call.1} parent=57 // pred_check_branch
          %200 = sbr.rel (%p198) target = $region66
        $region65: #{tpu_custom_call.1} parent=57 // pred_region
          %201 = vst [vmem:[#allocation2] sm:$0xff] 0
          %202 = vst [vmem:[#allocation2 + $0x8] sm:$0xff] 0
        $region66: #{tpu_custom_call.1} parent=57 // pred_fallthru
          _
        %v203 = vld [vmem:[%s172] sm:$0xff]
        %v204 = vld [vmem:[%s172 + $0x8] sm:$0xff]
        %vm205 = vcmp.ne.s32.totalorder %v203, 4294967295
        %vm206 = vcmp.ne.s32.totalorder %v204, 4294967295
        %s207 = sld [smem:[#allocation4 + $0x2]]
        %s208 = sld [smem:[#allocation4 + $0x3]]
        %v209 = vstv %s207
        %vm210 = vcmp.lt.s32.totalorder %v203, %v209
        %vm211 = vcmp.lt.s32.totalorder %v204, %v209
        %v212 = vstv %s208
        %vm213 = vcmp.gt.s32.totalorder %v203, %v212
        %vm214 = vcmp.gt.s32.totalorder %v204, %v212
        %vm215 = vmor %vm210, %vm213
        %vm216 = vmor %vm211, %vm214
        %vm217 = vmand %vm205, %vm215
        %vm218 = vmand %vm206, %vm216
        %s219 = smul.u32 %s28, 3
        %s220 = sadd.s32 %s219, %s29
        %v221 = vlaneseq
        %v222 = vshrl.u32 %v221, 7
        %s223 = smul.u32 %s220, 8
        %v224 = vstv %s223
        %v225 = vadd.s32 %v222, %v224
        %s226 = sld [smem:[#allocation4]]
        %v227 = vstv %s226
        %vm228 = vcmp.lt.s32.totalorder %v225, %v227
        %vm229 = vmand %vm217, %vm228
        %vm230 = vmand %vm218, %vm228
        %v231 = vld [vmem:[#allocation2] sm:$0xff]
        %v232 = vld [vmem:[#allocation2 + $0x8] sm:$0xff]
        %v233 = vsel %vm229, 1, 0
        %v234 = vsel %vm230, 1, 0
        %v235 = vadd.s32 %v231, %v233
        %v236 = vadd.s32 %v232, %v234
        %237 = vst [vmem:[#allocation2] sm:$0xff] %v235
        %238 = vst [vmem:[#allocation2 + $0x8] sm:$0xff] %v236
        %p239 = scmp.eq.s32.totalorder %s29, 2
        // Predicated region
        $region67: #{tpu_custom_call.1} parent=57 // pred_check
          %p240 = pneg %p239
        $region68: #{tpu_custom_call.1} parent=57 // pred_check_branch
          %242 = sbr.rel (%p240) target = $region70
        $region69: #{tpu_custom_call.1} parent=57 // pred_region
          %v243 = vld [vmem:[#allocation2] sm:$0xff]
          %v244 = vld [vmem:[#allocation2 + $0x8] sm:$0xff]
          %v245 = vand.u32 %v243, 65535
          %v246 = vshrl.u32 %v243, 16
          %v247 = vcvt.s32.f32 %v245
          %v248 = vcvt.s32.f32 %v246
          %249 = vadd.xlane.f32.xlu0 %v247
          %v250 = vpop.xlane.xlu0 %249
          %251 = vadd.xlane.f32.xlu0 %v248
          %v252 = vpop.xlane.xlu0 %251
          %v253 = vcvt.f32.s32 %v250
          %v254 = vcvt.f32.s32 %v252
          %v255 = vshll.u32 %v254, 16
          %v256 = vadd.s32 %v255, %v253
          %v257 = vand.u32 %v244, 65535
          %v258 = vshrl.u32 %v244, 16
          %v259 = vcvt.s32.f32 %v257
          %v260 = vcvt.s32.f32 %v258
          %261 = vadd.xlane.f32.xlu0 %v259
          %v262 = vpop.xlane.xlu0 %261
          %263 = vadd.xlane.f32.xlu0 %v260
          %v264 = vpop.xlane.xlu0 %263
          %v265 = vcvt.f32.s32 %v262
          %v266 = vcvt.f32.s32 %v264
          %v267 = vshll.u32 %v266, 16
          %v268 = vadd.s32 %v267, %v265
          %v269 = vrot.slane %v256, 4
          %v270 = vadd.s32 %v256, %v269
          %v271 = vrot.slane %v270, 2
          %v272 = vadd.s32 %v270, %v271
          %v273 = vrot.slane %v272, 1
          %v274 = vadd.s32 %v272, %v273
          %v275 = vrot.slane %v268, 4
          %v276 = vadd.s32 %v268, %v275
          %v277 = vrot.slane %v276, 2
          %v278 = vadd.s32 %v276, %v277
          %v279 = vrot.slane %v278, 1
          %v280 = vadd.s32 %v278, %v279
          %vm281 = vcmask 1041409
          %v282 = vsel %vm281, %v280, %v274
          %vm283 = vcmask 1024
          %284 = vst.msk [vmem:[%s196] sm:$0x3] %vm283, %v282
        $region70: #{tpu_custom_call.1} parent=57 // pred_fallthru
          _
        %p285 = scmp.lt.s32.totalorder %s28, 1
        %s286 = scalar_select %p285, %s28, 1
        %s287 = smul.addr %s286, 2
        %s288 = scalar_lea.vmem %s3, %s287
        // Predicated region
        $region71: #{tpu_custom_call.1} parent=57 // pred_check
          %p289 = pneg %p90
        $region72: #{tpu_custom_call.1} parent=57 // pred_check_branch
          %291 = sbr.rel (%p289) target = $region74
        $region73: #{tpu_custom_call.1} parent=57 // pred_region
          _
        $region74: #{tpu_custom_call.1} parent=57 // pred_fallthru
          _
      $region58: #{tpu_custom_call.1} parent=5 // pred_fallthru
        _
      %p292 = scmp.le.s32.totalorder 2, %s19
      // Predicated region
      $region75: #{tpu_custom_call.1} parent=5 // pred_check
        %p293 = pneg %p292
      $region76: #{tpu_custom_call.1} parent=5 // pred_check_branch
        %295 = sbr.rel (%p293) target = $region78
      $region77: #{tpu_custom_call.1} parent=5 // pred_region
        %s296 = ssub.s32 %s19, 2
        // Predicated region
        $region79: #{tpu_custom_call.1} parent=77 // pred_check
          %p297 = pneg %p96
        $region80: #{tpu_custom_call.1} parent=77 // pred_check_branch
          %299 = sbr.rel (%p297) target = $region82
        $region81: #{tpu_custom_call.1} parent=77 // pred_region
          %p300 = scmp.lt.s32.totalorder %s30, 1
          %s301 = scalar_select %p300, %s30, 1
          %s302 = smul.addr %s301, 2
          %s303 = scalar_lea.vmem %s3, %s302
        $region82: #{tpu_custom_call.1} parent=77 // pred_fallthru
          _
      $region78: #{tpu_custom_call.1} parent=5 // pred_fallthru
        _
    $region6: #{tpu_custom_call.1} parent=1 // loop_footer
      %s23 = sadd.s32 1, %s19
    $region7: #{tpu_custom_call.1} parent=1 // loop_footer_branch
      %18 = sbr.rel target = $region3
    $region8: #{tpu_custom_call.1} parent=1 // loop_exit
      _

</llo_original>
